<compile_context>
chip_gen: v5e
topology: v5e:2x2
jax: 0.10.0
libtpu: 0.0.40
codegen_flags: <defaults>
</compile_context>

<pallas_src>
import functools

import jax
import jax.numpy as jnp
from jax.experimental import pallas as pl
from jax.experimental.pallas import tpu as pltpu

EPS = 1e-6


# ----------------------------------------------------------------------------
# In-kernel math helpers (VPU/EUP friendly).
# ----------------------------------------------------------------------------
def _erf(x):
    # Abramowitz & Stegun 7.1.26 polynomial erf (poly abs err < 1.5e-7; the
    # approx-reciprocal + Newton step below adds ~1e-7-level relative error).
    # TODO(synk): switch to jax.lax.erf if/when erf_p gets a Mosaic lowering.
    a1, a2, a3, a4, a5 = (0.254829592, -0.284496736, 1.421413741,
                          -1.453152027, 1.061405429)
    p = 0.3275911
    ax = jnp.abs(x)
    den = 1.0 + p * ax
    r = pl.reciprocal(den, approx=True)
    t = r * (2.0 - den * r)          # one Newton step
    poly = ((((a5 * t + a4) * t + a3) * t + a2) * t + a1) * t
    y = 1.0 - poly * jnp.exp(-ax * ax)
    return jnp.where(x >= 0.0, y, -y)


def _gelu(x):  # exact (erf-based) GELU, matching torch.nn.GELU() default
    return 0.5 * x * (1.0 + _erf(x * 0.7071067811865476))


def _sigmoid(x):
    # EUP approx reciprocal + one Newton step instead of a full VALU divide.
    # Clamp keeps exp(-x) finite so the Newton step never sees inf*0.
    den = 1.0 + jnp.exp(-jnp.maximum(x, -60.0))
    r = pl.reciprocal(den, approx=True)
    return r * (2.0 - den * r)


def _local_reduce(wl_ref, z, use_mxu):
    """local_reduce 1x1 conv: (R, C) @ (C, T) -> (R, T)."""
    if use_mxu:
        # bf16 operands, f32 accumulation on the MXU (lane-wide N = T).
        return jnp.dot(wl_ref[...], z.astype(jnp.bfloat16),
                       preferred_element_type=jnp.float32)
    # Small C / R: unrolled f32 VPU contraction (MXU would be <1% utilized
    # and the bf16 pack would cost accuracy).
    wl = wl_ref[...]
    acc = wl[:, 0:1] * z[0:1, :]
    for c in range(1, wl.shape[1]):
        acc = acc + wl[:, c:c + 1] * z[c:c + 1, :]
    return acc


# ----------------------------------------------------------------------------
# Fused single-pass kernel (one image per grid step, x read from HBM once).
#   x block   : (1, C, HW)
#   wl_ref    : (R, C)        local_reduce weight, gamma folded in
#   colr_ref  : (R, 2)  f32   [folded local bias | spatial weight (local half)]
#   colc_ref  : (C, 3+2R) f32 [gamma | beta | be | wg^T (R cols) | we (R cols)]
#   rowr_ref  : (1, 2R+1) f32 [bg (R) | ws_global (R) | bs]
# ----------------------------------------------------------------------------
def _dffm_fused_kernel(x_ref, wl_ref, colr_ref, colc_ref, rowr_ref, o_ref,
                       *, use_mxu, hw):
    C = x_ref.shape[1]
    R = wl_ref.shape[0]

    xf = x_ref[0].astype(jnp.float32)                       # (C, HW)
    u = jnp.mean(xf, axis=0, keepdims=True)                 # (1, HW)
    d = xf - u
    var = jnp.mean(d * d, axis=0, keepdims=True)
    z = d * jax.lax.rsqrt(var + EPS)                        # (C, HW)

    # ---- local branch (LayerNorm affine folded into wl / bias) -------------
    xl = _gelu(_local_reduce(wl_ref, z, use_mxu) + colr_ref[:, 0:1])   # (R, HW)
    s_local = jnp.sum(xl * colr_ref[:, 1:2], axis=0, keepdims=True)    # (1, HW)

    # ---- global branch (tiny matvecs as broadcast + reduce, no transposes) -
    zmean = jnp.sum(z, axis=1, keepdims=True) * (1.0 / hw)             # (C, 1)
    pooled = colc_ref[:, 0:1] * zmean + colc_ref[:, 1:2]               # (C, 1)
    xg = _gelu(jnp.sum(colc_ref[:, 3:3 + R] * pooled, axis=0, keepdims=True)
               + rowr_ref[:, 0:R])                                      # (1, R)
    c_attn = _sigmoid(
        jnp.sum(colc_ref[:, 3 + R:3 + 2 * R] * xg, axis=1, keepdims=True)
        + colc_ref[:, 2:3])                                             # (C, 1)
    s_glob = (jnp.sum(rowr_ref[:, R:2 * R] * xg, axis=1, keepdims=True)
              + rowr_ref[:, 2 * R:2 * R + 1])                           # (1, 1)

    s_attn = _sigmoid(s_local + s_glob)                                 # (1, HW)
    o_ref[0] = (xf * (c_attn * s_attn)).astype(o_ref.dtype)


# ----------------------------------------------------------------------------
# Two-pass path, pass 1: accumulate sum over HW of the (un-affine) LayerNorm
# output z.  Output block (1, 1, C, 1) accumulated across the hw-tile axis.
# ----------------------------------------------------------------------------
def _dffm_pool_kernel(x_ref, zsum_ref, *, hw, tile, n_ts, masked):
    t = pl.program_id(2)

    @pl.when(t == 0)
    def _init():
        zsum_ref[...] = jnp.zeros_like(zsum_ref)

    x = x_ref[0].astype(jnp.float32)                        # (C, T)
    u = jnp.mean(x, axis=0, keepdims=True)
    d = x - u
    var = jnp.mean(d * d, axis=0, keepdims=True)
    z = d * jax.lax.rsqrt(var + EPS)                        # (C, T)
    if masked:
        # Tail tile: out-of-bounds columns hold unspecified data -> zero them
        # so they cannot bias the pooled sum.
        s = pl.program_id(1)
        start = (s * n_ts + t) * tile
        lane = jax.lax.broadcasted_iota(jnp.int32, (1, tile), 1)
        z = jnp.where(start + lane < hw, z, 0.0)
    zsum_ref[...] += jnp.sum(z, axis=1, keepdims=True)[None, None, :, :]


# ----------------------------------------------------------------------------
# Two-pass path, pass 2: tiled LayerNorm + local branch + attention apply.
#   cp_ref : (1, C+1, 1) f32, rows 0..C-1 = c_attn, row C = s_global + bs
# ----------------------------------------------------------------------------
def _dffm_apply_kernel(x_ref, wl_ref, rv_ref, cp_ref, o_ref, *, use_mxu):
    C = x_ref.shape[1]

    xf = x_ref[0].astype(jnp.float32)                       # (C, T)
    u = jnp.mean(xf, axis=0, keepdims=True)
    d = xf - u
    var = jnp.mean(d * d, axis=0, keepdims=True)
    z = d * jax.lax.rsqrt(var + EPS)                        # (C, T)

    xl = _gelu(_local_reduce(wl_ref, z, use_mxu) + rv_ref[:, 0:1])     # (R, T)
    s_local = jnp.sum(xl * rv_ref[:, 1:2], axis=0, keepdims=True)      # (1, T)
    s_attn = _sigmoid(s_local + cp_ref[0, C:C + 1, :])                 # (1, T)
    attn = cp_ref[0, 0:C, :] * s_attn                                  # (C, T)
    # Reuse xf (already in registers) for the identity multiply.
    o_ref[0] = (xf * attn).astype(o_ref.dtype)


# ----------------------------------------------------------------------------
# Wrapper
# ----------------------------------------------------------------------------
def _round_up(a, b):
    return (a + b - 1) // b * b


@functools.partial(
    jax.jit,
    static_argnames=("target_block_bytes", "fuse_max_bytes", "alias_input"))
def dffm_forward(x_nchw, params,
                 target_block_bytes=2 * 1024 * 1024,
                 fuse_max_bytes=2 * 1024 * 1024,
                 alias_input=False):
    B, C, H, W = x_nchw.shape
    HW = H * W
    R = params["wg"].shape[0]
    f32 = jnp.float32
    hp = jax.lax.Precision.HIGHEST
    itemsize = x_nchw.dtype.itemsize

    x3 = x_nchw.reshape(B, C, HW)          # pure view, no HBM copy

    # Shared per-image-independent parameter prep (LayerNorm affine folded
    # into the local_reduce conv).
    gamma = params["gamma"].astype(f32)
    beta = params["beta"].astype(f32)
    wl_f32 = params["wl"].astype(f32)
    wl_eff = wl_f32 * gamma[None, :]                        # (R, C)
    use_mxu = C > 32
    wl_k = wl_eff.astype(jnp.bfloat16) if use_mxu else wl_eff
    bl_eff = params["bl"].astype(f32) + jnp.dot(wl_f32, beta, precision=hp)
    wsl = params["ws"][0, :R].astype(f32)                   # spatial, local half
    wsg = params["ws"][0, R:].astype(f32)                   # spatial, global half
    rvec = jnp.stack([bl_eff, wsl], axis=1)                 # (R, 2)

    # 32 MiB scoped VMEM is safe on every generation (v7x physical = 64 MiB);
    # tile sizing below keeps double-buffered blocks + f32 temporaries under it.
    vmem_limit = 32 * 1024 * 1024
    # Only alias (in-place update) when the caller donates x; otherwise XLA
    # would insert a defensive copy that costs more than it saves.
    io_alias = {0: 0} if alias_input else {}

    # ------------------------- fused single-pass path ------------------------
    if C * HW * 4 <= fuse_max_bytes:
        colc = jnp.concatenate(
            [gamma[:, None], beta[:, None], params["be"].astype(f32)[:, None],
             params["wg"].astype(f32).T, params["we"].astype(f32)],
            axis=1)                                                     # (C, 3+2R)
        rowr = jnp.concatenate(
            [params["bg"].astype(f32), wsg,
             params["bs"].astype(f32)])[None, :]                        # (1, 2R+1)
        out3 = pl.pallas_call(
            functools.partial(_dffm_fused_kernel, use_mxu=use_mxu, hw=HW),
            out_shape=jax.ShapeDtypeStruct((B, C, HW), x_nchw.dtype),
            grid_spec=pltpu.PrefetchScalarGridSpec(
                num_scalar_prefetch=0,
                grid=(B,),
                in_specs=[
                    pl.BlockSpec((1, C, HW), lambda b: (b, 0, 0)),      # x
                    pl.BlockSpec((R, C), lambda b: (0, 0)),             # wl_eff
                    pl.BlockSpec((R, 2), lambda b: (0, 0)),             # bl|wsl
                    pl.BlockSpec((C, 3 + 2 * R), lambda b: (0, 0)),     # C-cols
                    pl.BlockSpec((1, 2 * R + 1), lambda b: (0, 0)),     # R-rows
                ],
                out_specs=pl.BlockSpec((1, C, HW), lambda b: (b, 0, 0)),
            ),
            input_output_aliases=io_alias,
            compiler_params=pltpu.CompilerParams(
                dimension_semantics=("parallel",),
                vmem_limit_bytes=vmem_limit),
        )(x3, wl_k, rvec, colc, rowr)
        return out3.reshape(B, C, H, W)

    # ------------------------- tiled two-pass path ---------------------------
    # Spatial tile: lane-dense (multiple of 128) and large enough (~2 MiB per
    # block) that DMA, not per-grid-step overhead, dominates.
    T = _round_up(max(128, target_block_bytes // (C * itemsize)), 128)
    T = min(T, _round_up(HW, 128))
    n_t = (HW + T - 1) // T
    # Split the pass-1 tile loop into two parallel halves when batch alone
    # cannot feed both v7x TensorCores.
    S = 2 if (B == 1 and n_t >= 2) else 1
    n_ts = (n_t + S - 1) // S
    masked = (n_t * T != HW) or (S * n_ts != n_t)

    def pool_x_map(b, s, t):
        # Clamp so over-hanging (fully masked) tiles of the second split never
        # index past the array.
        return (b, 0, jnp.minimum(s * n_ts + t, n_t - 1))

    # ---- pass 1: pooled LayerNorm output per image --------------------------
    # TODO(synk): bump the x spec to pipeline_mode=pl.Buffered(3) if xprof
    # still shows exposed DMA at tile boundaries.
    zsum = pl.pallas_call(
        functools.partial(_dffm_pool_kernel, hw=HW, tile=T, n_ts=n_ts,
                          masked=masked),
        out_shape=jax.ShapeDtypeStruct((B, S, C, 1), f32),
        grid_spec=pltpu.PrefetchScalarGridSpec(
            num_scalar_prefetch=0,
            grid=(B, S, n_ts),
            in_specs=[pl.BlockSpec((1, C, T), pool_x_map)],
            out_specs=pl.BlockSpec((1, 1, C, 1), lambda b, s, t: (b, s, 0, 0)),
        ),
        compiler_params=pltpu.CompilerParams(
            dimension_semantics=("parallel", "parallel", "arbitrary"),
            vmem_limit_bytes=vmem_limit),
    )(x3)

    # ---- tiny per-image glue (plain XLA) ------------------------------------
    pooled = gamma[None, :] * (jnp.sum(zsum[..., 0], axis=1) / HW) + beta[None, :]
    xg = jax.nn.gelu(jnp.dot(pooled, params["wg"].T.astype(f32), precision=hp)
                     + params["bg"].astype(f32), approximate=False)     # (B, R)
    c_attn = jax.nn.sigmoid(
        jnp.dot(xg, params["we"].T.astype(f32), precision=hp)
        + params["be"].astype(f32))                                     # (B, C)
    sg = jnp.dot(xg, wsg, precision=hp) + params["bs"].astype(f32)[0]   # (B,)
    cpack = jnp.concatenate([c_attn, sg[:, None]], axis=1)[:, :, None]  # (B,C+1,1)

    # ---- pass 2: tiled per-pixel work + apply --------------------------------
    out3 = pl.pallas_call(
        functools.partial(_dffm_apply_kernel, use_mxu=use_mxu),
        out_shape=jax.ShapeDtypeStruct((B, C, HW), x_nchw.dtype),
        grid_spec=pltpu.PrefetchScalarGridSpec(
            num_scalar_prefetch=0,
            grid=(B, n_t),
            in_specs=[
                pl.BlockSpec((1, C, T), lambda b, t: (b, 0, t)),        # x
                pl.BlockSpec((R, C), lambda b, t: (0, 0)),              # wl_eff
                pl.BlockSpec((R, 2), lambda b, t: (0, 0)),              # bl|wsl
                pl.BlockSpec((1, C + 1, 1), lambda b, t: (b, 0, 0)),    # c_attn|sg
            ],
            out_specs=pl.BlockSpec((1, C, T), lambda b, t: (b, 0, t)),
        ),
        input_output_aliases=io_alias,
        compiler_params=pltpu.CompilerParams(
            dimension_semantics=("parallel", "parallel"),
            vmem_limit_bytes=vmem_limit),
    )(x3, wl_k, rvec, cpack)

    return out3.reshape(B, C, H, W)


# ----------------------------------------------------------------------------
# Pure-JAX reference mirroring the PyTorch forward (NCHW).
# ----------------------------------------------------------------------------
def dffm_reference(x, p):
    hp = jax.lax.Precision.HIGHEST
    u = jnp.mean(x, axis=1, keepdims=True)
    var = jnp.mean((x - u) ** 2, axis=1, keepdims=True)
    xn = (x - u) / jnp.sqrt(var + EPS)
    xn = p["gamma"][None, :, None, None] * xn + p["beta"][None, :, None, None]
    pooled = jnp.mean(xn, axis=(2, 3))                                       # (B, C)
    xg = jax.nn.gelu(jnp.dot(pooled, p["wg"].T, precision=hp) + p["bg"],
                     approximate=False)                                      # (B, R)
    c_attn = jax.nn.sigmoid(jnp.dot(xg, p["we"].T, precision=hp) + p["be"])  # (B, C)
    xl = jax.nn.gelu(jnp.einsum("bchw,rc->brhw", xn, p["wl"], precision=hp)
                     + p["bl"][None, :, None, None], approximate=False)      # (B,R,H,W)
    cat = jnp.concatenate(
        [xl, jnp.broadcast_to(xg[:, :, None, None], xl.shape)], axis=1)      # (B,2R,H,W)
    s_attn = jax.nn.sigmoid(jnp.einsum("bkhw,ok->bohw", cat, p["ws"], precision=hp)
                            + p["bs"][None, :, None, None])                  # (B,1,H,W)
    return x * (c_attn[:, :, None, None] * s_attn)


if __name__ == "__main__":
    def make_params(key, C, R):
        ks = jax.random.split(key, 10)
        return {
            "gamma": 1.0 + 0.1 * jax.random.normal(ks[0], (C,), jnp.float32),
            "beta": 0.1 * jax.random.normal(ks[1], (C,), jnp.float32),
            "wg": 0.2 * jax.random.normal(ks[2], (R, C), jnp.float32),   # global_reduce
            "bg": 0.1 * jax.random.normal(ks[3], (R,), jnp.float32),
            "we": 0.2 * jax.random.normal(ks[4], (C, R), jnp.float32),   # channel_expand
            "be": 0.1 * jax.random.normal(ks[5], (C,), jnp.float32),
            "wl": 0.2 * jax.random.normal(ks[6], (R, C), jnp.float32),   # local_reduce
            "bl": 0.1 * jax.random.normal(ks[7], (R,), jnp.float32),
            "ws": 0.2 * jax.random.normal(ks[8], (1, 2 * R), jnp.float32),  # spatial_expand
            "bs": 0.1 * jax.random.normal(ks[9], (1,), jnp.float32),
        }

    key = jax.random.PRNGKey(0)
    k_pa, k_xa, k_pb = jax.random.split(key, 3)

    # --- Test A: fused single-pass path (whole image fits in VMEM) ----------
    B, C, H, W = 2, 8, 16, 16
    R = int(C * 0.25)  # reduce_channels = 2
    pa = make_params(k_pa, C, R)
    xa = jax.random.normal(k_xa, (B, C, H, W), jnp.float32)
    out_a = jax.block_until_ready(dffm_forward(xa, pa))
    ref_a = dffm_reference(xa, pa)
    assert out_a.shape == xa.shape and out_a.dtype == xa.dtype
    if not jnp.allclose(out_a, ref_a, atol=1e-4, rtol=1e-4):
        raise AssertionError(
            f"fused path mismatch: max abs diff = "
            f"{float(jnp.max(jnp.abs(out_a - ref_a)))}")

    # --- Test B: forced tiled two-pass path ----------------------------------
    # B=1 exercises the split (dual-core) pool pass; HW=324 with T=128 gives a
    # masked tail tile and a clamped overhang tile.
    Bb, Cb, Hb, Wb = 1, 8, 18, 18
    Rb = int(Cb * 0.25)
    pb = make_params(k_pb, Cb, Rb)
    xb = jax.random.normal(jax.random.PRNGKey(7), (Bb, Cb, Hb, Wb), jnp.float32)
    out_b = jax.block_until_ready(
        dffm_forward(xb, pb, target_block_bytes=4096, fuse_max_bytes=0))
    ref_b = dffm_reference(xb, pb)
    assert out_b.shape == xb.shape and out_b.dtype == xb.dtype
    if not jnp.allclose(out_b, ref_b, atol=1e-4, rtol=1e-4):
        raise AssertionError(
            f"two-pass path mismatch: max abs diff = "
            f"{float(jnp.max(jnp.abs(out_b - ref_b)))}")

    print("KERNEL_OK")
</pallas_src>

<mosaic_0001>
module attributes {stable_mosaic.version = 11 : i64} {
  func.func @_dffm_fused_kernel(%arg0: i32, %arg1: memref<1x8x256xf32, #tpu.memory_space<vmem>>, %arg2: memref<2x8xf32, #tpu.memory_space<vmem>>, %arg3: memref<2x2xf32, #tpu.memory_space<vmem>>, %arg4: memref<8x7xf32, #tpu.memory_space<vmem>>, %arg5: memref<1x5xf32, #tpu.memory_space<vmem>>, %arg6: memref<1x8x256xf32, #tpu.memory_space<vmem>>) attributes {dimension_semantics = [#tpu.dimension_semantics<parallel>], iteration_bounds = array<i64: 2>, scalar_prefetch = 0 : i64, scratch_operands = 0 : i64, tpu.core_type = #tpu.core_type<tc>, window_params = [{transform_indices = @transform_0, window_bounds = array<i64: 1, 8, 256>}, {pipeline_mode = #tpu.pipeline_mode<synchronous>, transform_indices = @transform_1, window_bounds = array<i64: 2, 8>}, {pipeline_mode = #tpu.pipeline_mode<synchronous>, transform_indices = @transform_2, window_bounds = array<i64: 2, 2>}, {pipeline_mode = #tpu.pipeline_mode<synchronous>, transform_indices = @transform_3, window_bounds = array<i64: 8, 7>}, {pipeline_mode = #tpu.pipeline_mode<synchronous>, transform_indices = @transform_4, window_bounds = array<i64: 1, 5>}, {transform_indices = @transform_5, window_bounds = array<i64: 1, 8, 256>}]} {
    %c0 = arith.constant 0 : index
    %c0_0 = arith.constant 0 : index
    %c0_1 = arith.constant 0 : index
    %0 = vector.load %arg1[%c0, %c0_0, %c0_1] : memref<1x8x256xf32, #tpu.memory_space<vmem>>, vector<1x8x256xf32>
    %1 = vector.shape_cast %0 : vector<1x8x256xf32> to vector<8x256xf32>
    %cst = arith.constant dense<0.000000e+00> : vector<256xf32>
    %2 = vector.multi_reduction <add>, %1, %cst [0] : vector<8x256xf32> to vector<256xf32>
    %3 = vector.shape_cast %2 : vector<256xf32> to vector<1x256xf32>
    %cst_2 = arith.constant 8.000000e+00 : f32
    %4 = vector.broadcast %cst_2 : f32 to vector<1x256xf32>
    %5 = arith.divf %3, %4 : vector<1x256xf32>
    %6 = vector.broadcast %5 : vector<1x256xf32> to vector<8x256xf32>
    %7 = arith.subf %1, %6 : vector<8x256xf32>
    %8 = arith.mulf %7, %7 : vector<8x256xf32>
    %cst_3 = arith.constant dense<0.000000e+00> : vector<256xf32>
    %9 = vector.multi_reduction <add>, %8, %cst_3 [0] : vector<8x256xf32> to vector<256xf32>
    %10 = vector.shape_cast %9 : vector<256xf32> to vector<1x256xf32>
    %cst_4 = arith.constant 8.000000e+00 : f32
    %11 = vector.broadcast %cst_4 : f32 to vector<1x256xf32>
    %12 = arith.divf %10, %11 : vector<1x256xf32>
    %cst_5 = arith.constant 9.99999997E-7 : f32
    %13 = vector.broadcast %cst_5 : f32 to vector<1x256xf32>
    %14 = arith.addf %12, %13 : vector<1x256xf32>
    %15 = math.rsqrt %14 : vector<1x256xf32>
    %16 = vector.broadcast %15 : vector<1x256xf32> to vector<8x256xf32>
    %17 = arith.mulf %7, %16 : vector<8x256xf32>
    %c0_6 = arith.constant 0 : index
    %c0_7 = arith.constant 0 : index
    %18 = vector.load %arg2[%c0_6, %c0_7] : memref<2x8xf32, #tpu.memory_space<vmem>>, vector<2x8xf32>
    %19 = vector.extract_strided_slice %18 {offsets = [0, 0], sizes = [2, 1], strides = [1, 1]} : vector<2x8xf32> to vector<2x1xf32>
    %20 = vector.extract_strided_slice %17 {offsets = [0, 0], sizes = [1, 256], strides = [1, 1]} : vector<8x256xf32> to vector<1x256xf32>
    %21 = vector.broadcast %19 : vector<2x1xf32> to vector<2x256xf32>
    %22 = vector.broadcast %20 : vector<1x256xf32> to vector<2x256xf32>
    %23 = arith.mulf %21, %22 : vector<2x256xf32>
    %24 = vector.extract_strided_slice %18 {offsets = [0, 1], sizes = [2, 1], strides = [1, 1]} : vector<2x8xf32> to vector<2x1xf32>
    %25 = vector.extract_strided_slice %17 {offsets = [1, 0], sizes = [1, 256], strides = [1, 1]} : vector<8x256xf32> to vector<1x256xf32>
    %26 = vector.broadcast %24 : vector<2x1xf32> to vector<2x256xf32>
    %27 = vector.broadcast %25 : vector<1x256xf32> to vector<2x256xf32>
    %28 = arith.mulf %26, %27 : vector<2x256xf32>
    %29 = arith.addf %23, %28 : vector<2x256xf32>
    %30 = vector.extract_strided_slice %18 {offsets = [0, 2], sizes = [2, 1], strides = [1, 1]} : vector<2x8xf32> to vector<2x1xf32>
    %31 = vector.extract_strided_slice %17 {offsets = [2, 0], sizes = [1, 256], strides = [1, 1]} : vector<8x256xf32> to vector<1x256xf32>
    %32 = vector.broadcast %30 : vector<2x1xf32> to vector<2x256xf32>
    %33 = vector.broadcast %31 : vector<1x256xf32> to vector<2x256xf32>
    %34 = arith.mulf %32, %33 : vector<2x256xf32>
    %35 = arith.addf %29, %34 : vector<2x256xf32>
    %36 = vector.extract_strided_slice %18 {offsets = [0, 3], sizes = [2, 1], strides = [1, 1]} : vector<2x8xf32> to vector<2x1xf32>
    %37 = vector.extract_strided_slice %17 {offsets = [3, 0], sizes = [1, 256], strides = [1, 1]} : vector<8x256xf32> to vector<1x256xf32>
    %38 = vector.broadcast %36 : vector<2x1xf32> to vector<2x256xf32>
    %39 = vector.broadcast %37 : vector<1x256xf32> to vector<2x256xf32>
    %40 = arith.mulf %38, %39 : vector<2x256xf32>
    %41 = arith.addf %35, %40 : vector<2x256xf32>
    %42 = vector.extract_strided_slice %18 {offsets = [0, 4], sizes = [2, 1], strides = [1, 1]} : vector<2x8xf32> to vector<2x1xf32>
    %43 = vector.extract_strided_slice %17 {offsets = [4, 0], sizes = [1, 256], strides = [1, 1]} : vector<8x256xf32> to vector<1x256xf32>
    %44 = vector.broadcast %42 : vector<2x1xf32> to vector<2x256xf32>
    %45 = vector.broadcast %43 : vector<1x256xf32> to vector<2x256xf32>
    %46 = arith.mulf %44, %45 : vector<2x256xf32>
    %47 = arith.addf %41, %46 : vector<2x256xf32>
    %48 = vector.extract_strided_slice %18 {offsets = [0, 5], sizes = [2, 1], strides = [1, 1]} : vector<2x8xf32> to vector<2x1xf32>
    %49 = vector.extract_strided_slice %17 {offsets = [5, 0], sizes = [1, 256], strides = [1, 1]} : vector<8x256xf32> to vector<1x256xf32>
    %50 = vector.broadcast %48 : vector<2x1xf32> to vector<2x256xf32>
    %51 = vector.broadcast %49 : vector<1x256xf32> to vector<2x256xf32>
    %52 = arith.mulf %50, %51 : vector<2x256xf32>
    %53 = arith.addf %47, %52 : vector<2x256xf32>
    %54 = vector.extract_strided_slice %18 {offsets = [0, 6], sizes = [2, 1], strides = [1, 1]} : vector<2x8xf32> to vector<2x1xf32>
    %55 = vector.extract_strided_slice %17 {offsets = [6, 0], sizes = [1, 256], strides = [1, 1]} : vector<8x256xf32> to vector<1x256xf32>
    %56 = vector.broadcast %54 : vector<2x1xf32> to vector<2x256xf32>
    %57 = vector.broadcast %55 : vector<1x256xf32> to vector<2x256xf32>
    %58 = arith.mulf %56, %57 : vector<2x256xf32>
    %59 = arith.addf %53, %58 : vector<2x256xf32>
    %60 = vector.extract_strided_slice %18 {offsets = [0, 7], sizes = [2, 1], strides = [1, 1]} : vector<2x8xf32> to vector<2x1xf32>
    %61 = vector.extract_strided_slice %17 {offsets = [7, 0], sizes = [1, 256], strides = [1, 1]} : vector<8x256xf32> to vector<1x256xf32>
    %62 = vector.broadcast %60 : vector<2x1xf32> to vector<2x256xf32>
    %63 = vector.broadcast %61 : vector<1x256xf32> to vector<2x256xf32>
    %64 = arith.mulf %62, %63 : vector<2x256xf32>
    %65 = arith.addf %59, %64 : vector<2x256xf32>
    %c0_8 = arith.constant 0 : index
    %c0_9 = arith.constant 0 : index
    %66 = vector.load %arg3[%c0_8, %c0_9] : memref<2x2xf32, #tpu.memory_space<vmem>>, vector<2x1xf32>
    %67 = vector.broadcast %66 : vector<2x1xf32> to vector<2x256xf32>
    %68 = arith.addf %65, %67 : vector<2x256xf32>
    %cst_10 = arith.constant 5.000000e-01 : f32
    %69 = vector.broadcast %cst_10 : f32 to vector<2x256xf32>
    %70 = arith.mulf %69, %68 : vector<2x256xf32>
    %cst_11 = arith.constant 0.707106769 : f32
    %71 = vector.broadcast %cst_11 : f32 to vector<2x256xf32>
    %72 = arith.mulf %68, %71 : vector<2x256xf32>
    %73 = math.absf %72 : vector<2x256xf32>
    %cst_12 = arith.constant 0.327591091 : f32
    %74 = vector.broadcast %cst_12 : f32 to vector<2x256xf32>
    %75 = arith.mulf %74, %73 : vector<2x256xf32>
    %cst_13 = arith.constant 1.000000e+00 : f32
    %76 = vector.broadcast %cst_13 : f32 to vector<2x256xf32>
    %77 = arith.addf %76, %75 : vector<2x256xf32>
    %78 = tpu.reciprocal %77 {approx = true} : vector<2x256xf32> -> vector<2x256xf32>
    %79 = arith.mulf %77, %78 : vector<2x256xf32>
    %cst_14 = arith.constant 2.000000e+00 : f32
    %80 = vector.broadcast %cst_14 : f32 to vector<2x256xf32>
    %81 = arith.subf %80, %79 : vector<2x256xf32>
    %82 = arith.mulf %78, %81 : vector<2x256xf32>
    %cst_15 = arith.constant 1.06140542 : f32
    %83 = vector.broadcast %cst_15 : f32 to vector<2x256xf32>
    %84 = arith.mulf %83, %82 : vector<2x256xf32>
    %cst_16 = arith.constant -1.45315206 : f32
    %85 = vector.broadcast %cst_16 : f32 to vector<2x256xf32>
    %86 = arith.addf %84, %85 : vector<2x256xf32>
    %87 = arith.mulf %86, %82 : vector<2x256xf32>
    %cst_17 = arith.constant 1.42141378 : f32
    %88 = vector.broadcast %cst_17 : f32 to vector<2x256xf32>
    %89 = arith.addf %87, %88 : vector<2x256xf32>
    %90 = arith.mulf %89, %82 : vector<2x256xf32>
    %cst_18 = arith.constant -0.284496725 : f32
    %91 = vector.broadcast %cst_18 : f32 to vector<2x256xf32>
    %92 = arith.addf %90, %91 : vector<2x256xf32>
    %93 = arith.mulf %92, %82 : vector<2x256xf32>
    %cst_19 = arith.constant 0.254829586 : f32
    %94 = vector.broadcast %cst_19 : f32 to vector<2x256xf32>
    %95 = arith.addf %93, %94 : vector<2x256xf32>
    %96 = arith.mulf %95, %82 : vector<2x256xf32>
    %cst_20 = arith.constant 0.000000e+00 : f32
    %97 = vector.broadcast %cst_20 : f32 to vector<2x256xf32>
    %98 = arith.subf %97, %73 : vector<2x256xf32>
    %99 = arith.mulf %98, %73 : vector<2x256xf32>
    %100 = math.exp %99 : vector<2x256xf32>
    %101 = arith.mulf %96, %100 : vector<2x256xf32>
    %cst_21 = arith.constant 1.000000e+00 : f32
    %102 = vector.broadcast %cst_21 : f32 to vector<2x256xf32>
    %103 = arith.subf %102, %101 : vector<2x256xf32>
    %cst_22 = arith.constant 0.000000e+00 : f32
    %104 = vector.broadcast %cst_22 : f32 to vector<2x256xf32>
    %105 = arith.cmpf oge, %72, %104 : vector<2x256xf32>
    %cst_23 = arith.constant 0.000000e+00 : f32
    %106 = vector.broadcast %cst_23 : f32 to vector<2x256xf32>
    %107 = arith.subf %106, %103 : vector<2x256xf32>
    %108 = arith.select %105, %103, %107 : vector<2x256xi1>, vector<2x256xf32>
    %cst_24 = arith.constant 1.000000e+00 : f32
    %109 = vector.broadcast %cst_24 : f32 to vector<2x256xf32>
    %110 = arith.addf %109, %108 : vector<2x256xf32>
    %111 = arith.mulf %70, %110 : vector<2x256xf32>
    %c0_25 = arith.constant 0 : index
    %c1 = arith.constant 1 : index
    %112 = vector.load %arg3[%c0_25, %c1] : memref<2x2xf32, #tpu.memory_space<vmem>>, vector<2x1xf32>
    %113 = vector.broadcast %112 : vector<2x1xf32> to vector<2x256xf32>
    %114 = arith.mulf %111, %113 : vector<2x256xf32>
    %cst_26 = arith.constant dense<0.000000e+00> : vector<256xf32>
    %115 = vector.multi_reduction <add>, %114, %cst_26 [0] : vector<2x256xf32> to vector<256xf32>
    %116 = vector.shape_cast %115 : vector<256xf32> to vector<1x256xf32>
    %cst_27 = arith.constant dense<0.000000e+00> : vector<8xf32>
    %117 = vector.multi_reduction <add>, %17, %cst_27 [1] : vector<8x256xf32> to vector<8xf32>
    %118 = vector.shape_cast %117 : vector<8xf32> to vector<8x1xf32>
    %cst_28 = arith.constant 3.906250e-03 : f32
    %119 = vector.broadcast %cst_28 : f32 to vector<8x1xf32>
    %120 = arith.mulf %118, %119 : vector<8x1xf32>
    %c0_29 = arith.constant 0 : index
    %c0_30 = arith.constant 0 : index
    %121 = vector.load %arg4[%c0_29, %c0_30] : memref<8x7xf32, #tpu.memory_space<vmem>>, vector<8x1xf32>
    %122 = arith.mulf %121, %120 : vector<8x1xf32>
    %c0_31 = arith.constant 0 : index
    %c1_32 = arith.constant 1 : index
    %123 = vector.load %arg4[%c0_31, %c1_32] : memref<8x7xf32, #tpu.memory_space<vmem>>, vector<8x1xf32>
    %124 = arith.addf %122, %123 : vector<8x1xf32>
    %c0_33 = arith.constant 0 : index
    %c3 = arith.constant 3 : index
    %125 = vector.load %arg4[%c0_33, %c3] : memref<8x7xf32, #tpu.memory_space<vmem>>, vector<8x2xf32>
    %126 = vector.broadcast %124 : vector<8x1xf32> to vector<8x2xf32>
    %127 = arith.mulf %125, %126 : vector<8x2xf32>
    %cst_34 = arith.constant dense<0.000000e+00> : vector<2xf32>
    %128 = vector.multi_reduction <add>, %127, %cst_34 [0] : vector<8x2xf32> to vector<2xf32>
    %129 = vector.shape_cast %128 : vector<2xf32> to vector<1x2xf32>
    %c0_35 = arith.constant 0 : index
    %c0_36 = arith.constant 0 : index
    %130 = vector.load %arg5[%c0_35, %c0_36] : memref<1x5xf32, #tpu.memory_space<vmem>>, vector<1x2xf32>
    %131 = arith.addf %129, %130 : vector<1x2xf32>
    %cst_37 = arith.constant 5.000000e-01 : f32
    %132 = vector.broadcast %cst_37 : f32 to vector<1x2xf32>
    %133 = arith.mulf %132, %131 : vector<1x2xf32>
    %cst_38 = arith.constant 0.707106769 : f32
    %134 = vector.broadcast %cst_38 : f32 to vector<1x2xf32>
    %135 = arith.mulf %131, %134 : vector<1x2xf32>
    %136 = math.absf %135 : vector<1x2xf32>
    %cst_39 = arith.constant 0.327591091 : f32
    %137 = vector.broadcast %cst_39 : f32 to vector<1x2xf32>
    %138 = arith.mulf %137, %136 : vector<1x2xf32>
    %cst_40 = arith.constant 1.000000e+00 : f32
    %139 = vector.broadcast %cst_40 : f32 to vector<1x2xf32>
    %140 = arith.addf %139, %138 : vector<1x2xf32>
    %141 = tpu.reciprocal %140 {approx = true} : vector<1x2xf32> -> vector<1x2xf32>
    %142 = arith.mulf %140, %141 : vector<1x2xf32>
    %cst_41 = arith.constant 2.000000e+00 : f32
    %143 = vector.broadcast %cst_41 : f32 to vector<1x2xf32>
    %144 = arith.subf %143, %142 : vector<1x2xf32>
    %145 = arith.mulf %141, %144 : vector<1x2xf32>
    %cst_42 = arith.constant 1.06140542 : f32
    %146 = vector.broadcast %cst_42 : f32 to vector<1x2xf32>
    %147 = arith.mulf %146, %145 : vector<1x2xf32>
    %cst_43 = arith.constant -1.45315206 : f32
    %148 = vector.broadcast %cst_43 : f32 to vector<1x2xf32>
    %149 = arith.addf %147, %148 : vector<1x2xf32>
    %150 = arith.mulf %149, %145 : vector<1x2xf32>
    %cst_44 = arith.constant 1.42141378 : f32
    %151 = vector.broadcast %cst_44 : f32 to vector<1x2xf32>
    %152 = arith.addf %150, %151 : vector<1x2xf32>
    %153 = arith.mulf %152, %145 : vector<1x2xf32>
    %cst_45 = arith.constant -0.284496725 : f32
    %154 = vector.broadcast %cst_45 : f32 to vector<1x2xf32>
    %155 = arith.addf %153, %154 : vector<1x2xf32>
    %156 = arith.mulf %155, %145 : vector<1x2xf32>
    %cst_46 = arith.constant 0.254829586 : f32
    %157 = vector.broadcast %cst_46 : f32 to vector<1x2xf32>
    %158 = arith.addf %156, %157 : vector<1x2xf32>
    %159 = arith.mulf %158, %145 : vector<1x2xf32>
    %cst_47 = arith.constant 0.000000e+00 : f32
    %160 = vector.broadcast %cst_47 : f32 to vector<1x2xf32>
    %161 = arith.subf %160, %136 : vector<1x2xf32>
    %162 = arith.mulf %161, %136 : vector<1x2xf32>
    %163 = math.exp %162 : vector<1x2xf32>
    %164 = arith.mulf %159, %163 : vector<1x2xf32>
    %cst_48 = arith.constant 1.000000e+00 : f32
    %165 = vector.broadcast %cst_48 : f32 to vector<1x2xf32>
    %166 = arith.subf %165, %164 : vector<1x2xf32>
    %cst_49 = arith.constant 0.000000e+00 : f32
    %167 = vector.broadcast %cst_49 : f32 to vector<1x2xf32>
    %168 = arith.cmpf oge, %135, %167 : vector<1x2xf32>
    %cst_50 = arith.constant 0.000000e+00 : f32
    %169 = vector.broadcast %cst_50 : f32 to vector<1x2xf32>
    %170 = arith.subf %169, %166 : vector<1x2xf32>
    %171 = arith.select %168, %166, %170 : vector<1x2xi1>, vector<1x2xf32>
    %cst_51 = arith.constant 1.000000e+00 : f32
    %172 = vector.broadcast %cst_51 : f32 to vector<1x2xf32>
    %173 = arith.addf %172, %171 : vector<1x2xf32>
    %174 = arith.mulf %133, %173 : vector<1x2xf32>
    %c0_52 = arith.constant 0 : index
    %c5 = arith.constant 5 : index
    %175 = vector.load %arg4[%c0_52, %c5] : memref<8x7xf32, #tpu.memory_space<vmem>>, vector<8x2xf32>
    %176 = vector.broadcast %174 : vector<1x2xf32> to vector<8x2xf32>
    %177 = arith.mulf %175, %176 : vector<8x2xf32>
    %cst_53 = arith.constant dense<0.000000e+00> : vector<8xf32>
    %178 = vector.multi_reduction <add>, %177, %cst_53 [1] : vector<8x2xf32> to vector<8xf32>
    %179 = vector.shape_cast %178 : vector<8xf32> to vector<8x1xf32>
    %c0_54 = arith.constant 0 : index
    %c2 = arith.constant 2 : index
    %180 = vector.load %arg4[%c0_54, %c2] : memref<8x7xf32, #tpu.memory_space<vmem>>, vector<8x1xf32>
    %181 = arith.addf %179, %180 : vector<8x1xf32>
    %cst_55 = arith.constant -6.000000e+01 : f32
    %182 = vector.broadcast %cst_55 : f32 to vector<8x1xf32>
    %183 = arith.maximumf %181, %182 : vector<8x1xf32>
    %cst_56 = arith.constant 0.000000e+00 : f32
    %184 = vector.broadcast %cst_56 : f32 to vector<8x1xf32>
    %185 = arith.subf %184, %183 : vector<8x1xf32>
    %186 = math.exp %185 : vector<8x1xf32>
    %cst_57 = arith.constant 1.000000e+00 : f32
    %187 = vector.broadcast %cst_57 : f32 to vector<8x1xf32>
    %188 = arith.addf %187, %186 : vector<8x1xf32>
    %189 = tpu.reciprocal %188 {approx = true} : vector<8x1xf32> -> vector<8x1xf32>
    %190 = arith.mulf %188, %189 : vector<8x1xf32>
    %cst_58 = arith.constant 2.000000e+00 : f32
    %191 = vector.broadcast %cst_58 : f32 to vector<8x1xf32>
    %192 = arith.subf %191, %190 : vector<8x1xf32>
    %193 = arith.mulf %189, %192 : vector<8x1xf32>
    %c0_59 = arith.constant 0 : index
    %c2_60 = arith.constant 2 : index
    %194 = vector.load %arg5[%c0_59, %c2_60] : memref<1x5xf32, #tpu.memory_space<vmem>>, vector<1x2xf32>
    %195 = arith.mulf %194, %174 : vector<1x2xf32>
    %cst_61 = arith.constant dense<0.000000e+00> : vector<1xf32>
    %196 = vector.multi_reduction <add>, %195, %cst_61 [1] : vector<1x2xf32> to vector<1xf32>
    %197 = vector.shape_cast %196 : vector<1xf32> to vector<1x1xf32>
    %c0_62 = arith.constant 0 : index
    %c4 = arith.constant 4 : index
    %198 = vector.load %arg5[%c0_62, %c4] : memref<1x5xf32, #tpu.memory_space<vmem>>, vector<1x1xf32>
    %199 = arith.addf %197, %198 : vector<1x1xf32>
    %200 = vector.broadcast %199 : vector<1x1xf32> to vector<1x256xf32>
    %201 = arith.addf %116, %200 : vector<1x256xf32>
    %cst_63 = arith.constant -6.000000e+01 : f32
    %202 = vector.broadcast %cst_63 : f32 to vector<1x256xf32>
    %203 = arith.maximumf %201, %202 : vector<1x256xf32>
    %cst_64 = arith.constant 0.000000e+00 : f32
    %204 = vector.broadcast %cst_64 : f32 to vector<1x256xf32>
    %205 = arith.subf %204, %203 : vector<1x256xf32>
    %206 = math.exp %205 : vector<1x256xf32>
    %cst_65 = arith.constant 1.000000e+00 : f32
    %207 = vector.broadcast %cst_65 : f32 to vector<1x256xf32>
    %208 = arith.addf %207, %206 : vector<1x256xf32>
    %209 = tpu.reciprocal %208 {approx = true} : vector<1x256xf32> -> vector<1x256xf32>
    %210 = arith.mulf %208, %209 : vector<1x256xf32>
    %cst_66 = arith.constant 2.000000e+00 : f32
    %211 = vector.broadcast %cst_66 : f32 to vector<1x256xf32>
    %212 = arith.subf %211, %210 : vector<1x256xf32>
    %213 = arith.mulf %209, %212 : vector<1x256xf32>
    %214 = vector.broadcast %193 : vector<8x1xf32> to vector<8x256xf32>
    %215 = vector.broadcast %213 : vector<1x256xf32> to vector<8x256xf32>
    %216 = arith.mulf %214, %215 : vector<8x256xf32>
    %217 = arith.mulf %1, %216 : vector<8x256xf32>
    %c0_67 = arith.constant 0 : index
    %c0_68 = arith.constant 0 : index
    %c0_69 = arith.constant 0 : index
    %218 = vector.load %arg6[%c0_67, %c0_68, %c0_69] : memref<1x8x256xf32, #tpu.memory_space<vmem>>, vector<1x8x256xf32>
    %219 = vector.shape_cast %218 : vector<1x8x256xf32> to vector<8x256xf32>
    %220 = vector.shape_cast %217 : vector<8x256xf32> to vector<1x8x256xf32>
    tpu.vector_store %arg6[%c0_67, %c0_68, %c0_69], %220 {strides = array<i32>} : memref<1x8x256xf32, #tpu.memory_space<vmem>>, vector<1x8x256xf32>,
    return
  }
  func.func @transform_0(%arg0: i32) -> (i32, i32, i32) {
    %c0_i32 = arith.constant 0 : i32
    %c0_i32_0 = arith.constant 0 : i32
    %c0_i32_1 = arith.constant 0 : i32
    return %arg0, %c0_i32, %c0_i32_0 : i32, i32, i32
  }
  func.func @transform_1(%arg0: i32) -> (i32, i32) {
    %c0_i32 = arith.constant 0 : i32
    %c0_i32_0 = arith.constant 0 : i32
    %c0_i32_1 = arith.constant 0 : i32
    return %c0_i32, %c0_i32_0 : i32, i32
  }
  func.func @transform_2(%arg0: i32) -> (i32, i32) {
    %c0_i32 = arith.constant 0 : i32
    %c0_i32_0 = arith.constant 0 : i32
    %c0_i32_1 = arith.constant 0 : i32
    return %c0_i32, %c0_i32_0 : i32, i32
  }
  func.func @transform_3(%arg0: i32) -> (i32, i32) {
    %c0_i32 = arith.constant 0 : i32
    %c0_i32_0 = arith.constant 0 : i32
    %c0_i32_1 = arith.constant 0 : i32
    return %c0_i32, %c0_i32_0 : i32, i32
  }
  func.func @transform_4(%arg0: i32) -> (i32, i32) {
    %c0_i32 = arith.constant 0 : i32
    %c0_i32_0 = arith.constant 0 : i32
    %c0_i32_1 = arith.constant 0 : i32
    return %c0_i32, %c0_i32_0 : i32, i32
  }
  func.func @transform_5(%arg0: i32) -> (i32, i32, i32) {
    %c0_i32 = arith.constant 0 : i32
    %c0_i32_0 = arith.constant 0 : i32
    %c0_i32_1 = arith.constant 0 : i32
    return %arg0, %c0_i32, %c0_i32_0 : i32, i32, i32
  }
}

</mosaic_0001>

<llo_original>
// kernel: dffm_forward.1
$region0: #{dffm_forward.1}
  #allocation0 [shape = 'u32[]', space=smem, size = 0x4, offset = 0x4, fixed_abs, tag = 'smem constant byte address 0x4 - core index']
  #allocation1 [shape = 'u32[72,128]{1,0:T(1,128)}', space=vmem, size = 0x9000, scoped, tag = 'internal scratch']
  %s0 = inlined_call_operand.vmem [shape: f32[2,8,256], index: 0, kind: input, shape index: {}]
  %s1 = inlined_call_operand.vmem [shape: f32[2,8], index: 1, kind: input, shape index: {}]
  %s2 = inlined_call_operand.vmem [shape: f32[2,2], index: 2, kind: input, shape index: {}]
  %s3 = inlined_call_operand.vmem [shape: f32[8,7], index: 3, kind: input, shape index: {}]
  %s4 = inlined_call_operand.vmem [shape: f32[1,5], index: 4, kind: input, shape index: {}]
  %s5 = inlined_call_operand.vmem [shape: f32[2,8,256], index: 5, kind: output, shape index: {}]
  %s6 = sld [smem:[#allocation0]]
  $region53: #{dffm_forward.1} parent=0
    _
  %s8 = ssub.s32 1, %s6
  %s9 = scalar_select 0, %s8, %s6
  loop: start=0, step=1, limit=4
  $region2: #{dffm_forward.1} parent=0 // loop_pre_header
    _
  $region3: #{dffm_forward.1} parent=0 // loop_header
    %s11 = sphi 0, %s15
    %p12 = scmp.ge.s32.totalorder %s11, 4
    %s21 = sphi 0, %s23
    %s24 = sphi 0, %s21
    %s25 = sphi 0, %s24
    %s41 = sphi 0, %s25
    %s45 = sphi 0, %s45
    %s47 = sphi 0, %s45
    %s48 = sphi 0, %s47
    %s62 = sphi 0, %s48
    %s66 = sphi 0, %s66
    %s68 = sphi 0, %s66
    %s69 = sphi 0, %s68
    %s83 = sphi 0, %s69
    %s87 = sphi 0, %s87
    %s89 = sphi 0, %s87
    %s90 = sphi 0, %s89
    %s104 = sphi 0, %s90
    %s108 = sphi 0, %s108
    %s110 = sphi 0, %s108
    %s111 = sphi 0, %s110
    %s125 = sphi 0, %s111
    %s131 = sphi 0, %s133
    %s134 = sphi 0, %s131
    %s135 = sphi 0, %s134
    %s151 = sphi 0, %s135
  $region4: #{dffm_forward.1} parent=0 // loop_header_branch
    %14 = sbr.rel (%p12) target = $region8
  $region5: #{dffm_forward.1} parent=0 // loop_body
    %s16 = ssub.s32 %s11, 1
    %s17 = ssub.s32 %s11, 2
    %s18 = sadd.s32 %s11, 1
    %s19 = ssub.s32 %s11, %s18
    %p20 = scmp.eq.s32.totalorder %s19, 0
    %s22 = sadd.s32 %s21, 1
    %s23 = scalar_select %p20, %s21, %s22
    %p26 = pneg %p20
    %p27 = scmp.eq.s32.totalorder %s11, 1
    %p28 = por %p26, %p27
    %p29 = scmp.ne.s32.totalorder %s21, %s24
    %p30 = scmp.eq.s32.totalorder %s11, 0
    %p31 = por %p29, %p30
    %p32 = scmp.ne.s32.totalorder %s21, %s24
    %p33 = scmp.eq.s32.totalorder %s16, 1
    %p34 = por %p32, %p33
    %p35 = scmp.ne.s32.totalorder %s24, %s25
    %p36 = scmp.eq.s32.totalorder %s16, 0
    %p37 = por %p35, %p36
    %p38 = scmp.ne.s32.totalorder %s24, %s25
    %p39 = scmp.eq.s32.totalorder %s17, 1
    %p40 = por %p38, %p39
    %p42 = scmp.ne.s32.totalorder %s25, %s41
    %p43 = scmp.eq.s32.totalorder %s17, 0
    %p44 = por %p42, %p43
    %s46 = sadd.s32 %s45, 1
    %p49 = scmp.eq.s32.totalorder %s11, 1
    %p50 = scmp.ne.s32.totalorder %s45, %s47
    %p51 = scmp.eq.s32.totalorder %s11, 0
    %p52 = por %p50, %p51
    %p53 = scmp.ne.s32.totalorder %s45, %s47
    %p54 = scmp.eq.s32.totalorder %s16, 1
    %p55 = por %p53, %p54
    %p56 = scmp.ne.s32.totalorder %s47, %s48
    %p57 = scmp.eq.s32.totalorder %s16, 0
    %p58 = por %p56, %p57
    %p59 = scmp.ne.s32.totalorder %s47, %s48
    %p60 = scmp.eq.s32.totalorder %s17, 1
    %p61 = por %p59, %p60
    %p63 = scmp.ne.s32.totalorder %s48, %s62
    %p64 = scmp.eq.s32.totalorder %s17, 0
    %p65 = por %p63, %p64
    %s67 = sadd.s32 %s66, 1
    %p70 = scmp.eq.s32.totalorder %s11, 1
    %p71 = scmp.ne.s32.totalorder %s66, %s68
    %p72 = scmp.eq.s32.totalorder %s11, 0
    %p73 = por %p71, %p72
    %p74 = scmp.ne.s32.totalorder %s66, %s68
    %p75 = scmp.eq.s32.totalorder %s16, 1
    %p76 = por %p74, %p75
    %p77 = scmp.ne.s32.totalorder %s68, %s69
    %p78 = scmp.eq.s32.totalorder %s16, 0
    %p79 = por %p77, %p78
    %p80 = scmp.ne.s32.totalorder %s68, %s69
    %p81 = scmp.eq.s32.totalorder %s17, 1
    %p82 = por %p80, %p81
    %p84 = scmp.ne.s32.totalorder %s69, %s83
    %p85 = scmp.eq.s32.totalorder %s17, 0
    %p86 = por %p84, %p85
    %s88 = sadd.s32 %s87, 1
    %p91 = scmp.eq.s32.totalorder %s11, 1
    %p92 = scmp.ne.s32.totalorder %s87, %s89
    %p93 = scmp.eq.s32.totalorder %s11, 0
    %p94 = por %p92, %p93
    %p95 = scmp.ne.s32.totalorder %s87, %s89
    %p96 = scmp.eq.s32.totalorder %s16, 1
    %p97 = por %p95, %p96
    %p98 = scmp.ne.s32.totalorder %s89, %s90
    %p99 = scmp.eq.s32.totalorder %s16, 0
    %p100 = por %p98, %p99
    %p101 = scmp.ne.s32.totalorder %s89, %s90
    %p102 = scmp.eq.s32.totalorder %s17, 1
    %p103 = por %p101, %p102
    %p105 = scmp.ne.s32.totalorder %s90, %s104
    %p106 = scmp.eq.s32.totalorder %s17, 0
    %p107 = por %p105, %p106
    %s109 = sadd.s32 %s108, 1
    %p112 = scmp.eq.s32.totalorder %s11, 1
    %p113 = scmp.ne.s32.totalorder %s108, %s110
    %p114 = scmp.eq.s32.totalorder %s11, 0
    %p115 = por %p113, %p114
    %p116 = scmp.ne.s32.totalorder %s108, %s110
    %p117 = scmp.eq.s32.totalorder %s16, 1
    %p118 = por %p116, %p117
    %p119 = scmp.ne.s32.totalorder %s110, %s111
    %p120 = scmp.eq.s32.totalorder %s16, 0
    %p121 = por %p119, %p120
    %p122 = scmp.ne.s32.totalorder %s110, %s111
    %p123 = scmp.eq.s32.totalorder %s17, 1
    %p124 = por %p122, %p123
    %p126 = scmp.ne.s32.totalorder %s111, %s125
    %p127 = scmp.eq.s32.totalorder %s17, 0
    %p128 = por %p126, %p127
    %s129 = ssub.s32 %s11, %s18
    %p130 = scmp.eq.s32.totalorder %s129, 0
    %s132 = sadd.s32 %s131, 1
    %s133 = scalar_select %p130, %s131, %s132
    %p136 = pneg %p130
    %p137 = scmp.eq.s32.totalorder %s11, 1
    %p138 = por %p136, %p137
    %p139 = scmp.ne.s32.totalorder %s131, %s134
    %p140 = scmp.eq.s32.totalorder %s11, 0
    %p141 = por %p139, %p140
    %p142 = scmp.ne.s32.totalorder %s131, %s134
    %p143 = scmp.eq.s32.totalorder %s16, 1
    %p144 = por %p142, %p143
    %p145 = scmp.ne.s32.totalorder %s134, %s135
    %p146 = scmp.eq.s32.totalorder %s16, 0
    %p147 = por %p145, %p146
    %p148 = scmp.ne.s32.totalorder %s134, %s135
    %p149 = scmp.eq.s32.totalorder %s17, 1
    %p150 = por %p148, %p149
    %p152 = scmp.ne.s32.totalorder %s135, %s151
    %p153 = scmp.eq.s32.totalorder %s17, 0
    %p154 = por %p152, %p153
    %p155 = scmp.le.s32.totalorder 1, %s11
    %p156 = scmp.lt.s32.totalorder %s11, 3
    %p157 = pnand %p155, %p156
    %p158 = pneg %p157
    // Predicated region
    $region9: #{dffm_forward.1} parent=5 // pred_check
      _
    $region10: #{dffm_forward.1} parent=5 // pred_check_branch
      %160 = sbr.rel (%p157) target = $region12
    $region11: #{dffm_forward.1} parent=5 // pred_region
      %s161 = ssub.s32 %s11, 1
      // Predicated region
      $region13: #{dffm_forward.1} parent=11 // pred_check
        %p162 = pneg %p58
      $region14: #{dffm_forward.1} parent=11 // pred_check_branch
        %164 = sbr.rel (%p162) target = $region16
      $region15: #{dffm_forward.1} parent=11 // pred_region
        _
      $region16: #{dffm_forward.1} parent=11 // pred_fallthru
        _
      // Predicated region
      $region17: #{dffm_forward.1} parent=11 // pred_check
        %p165 = pneg %p79
      $region18: #{dffm_forward.1} parent=11 // pred_check_branch
        %167 = sbr.rel (%p165) target = $region20
      $region19: #{dffm_forward.1} parent=11 // pred_region
        _
      $region20: #{dffm_forward.1} parent=11 // pred_fallthru
        _
      // Predicated region
      $region21: #{dffm_forward.1} parent=11 // pred_check
        %p168 = pneg %p100
      $region22: #{dffm_forward.1} parent=11 // pred_check_branch
        %170 = sbr.rel (%p168) target = $region24
      $region23: #{dffm_forward.1} parent=11 // pred_region
        _
      $region24: #{dffm_forward.1} parent=11 // pred_fallthru
        _
      // Predicated region
      $region25: #{dffm_forward.1} parent=11 // pred_check
        %p171 = pneg %p121
      $region26: #{dffm_forward.1} parent=11 // pred_check_branch
        %173 = sbr.rel (%p171) target = $region28
      $region27: #{dffm_forward.1} parent=11 // pred_region
        _
      $region28: #{dffm_forward.1} parent=11 // pred_fallthru
        _
    $region12: #{dffm_forward.1} parent=5 // pred_fallthru
      _
    %p174 = scmp.lt.s32.totalorder %s11, 2
    // Predicated region
    $region29: #{dffm_forward.1} parent=5 // pred_check
      %p175 = pneg %p174
    $region30: #{dffm_forward.1} parent=5 // pred_check_branch
      %177 = sbr.rel (%p175) target = $region32
    $region31: #{dffm_forward.1} parent=5 // pred_region
      // Predicated region
      $region33: #{dffm_forward.1} parent=31 // pred_check
        %p178 = pneg %p31
      $region34: #{dffm_forward.1} parent=31 // pred_check_branch
        %180 = sbr.rel (%p178) target = $region36
      $region35: #{dffm_forward.1} parent=31 // pred_region
        %p181 = scmp.lt.s32.totalorder %s11, 1
        %s182 = scalar_select %p181, %s11, 1
        %s183 = smul.addr %s182, 2
        %s184 = smul.addr %s183, 8
        %s185 = scalar_lea.vmem %s0, %s184
      $region36: #{dffm_forward.1} parent=31 // pred_fallthru
        _
    $region32: #{dffm_forward.1} parent=5 // pred_fallthru
      _
    %p186 = scmp.le.s32.totalorder 1, %s11
    %p187 = scmp.lt.s32.totalorder %s11, 3
    %p188 = pnand %p186, %p187
    %p189 = pneg %p188
    // Predicated region
    $region37: #{dffm_forward.1} parent=5 // pred_check
      _
    $region38: #{dffm_forward.1} parent=5 // pred_check_branch
      %191 = sbr.rel (%p188) target = $region40
    $region39: #{dffm_forward.1} parent=5 // pred_region
      %s192 = ssub.s32 %s11, 1
      %p193 = scmp.lt.s32.totalorder %s16, 1
      %s194 = scalar_select %p193, %s16, 1
      %s195 = smul.addr %s194, 2
      %s196 = smul.addr %s195, 8
      %s197 = scalar_lea.vmem %s0, %s196
      %p198 = pneg %p37
      %p199 = pneg %p34
      %p200 = pneg %p58
      %p201 = pneg %p55
      %p202 = pneg %p79
      %p203 = pneg %p76
      %p204 = pneg %p100
      %p205 = pneg %p97
      %p206 = pneg %p121
      %p207 = pneg %p118
      %p208 = pneg %p147
      %p209 = pneg %p144
      %p210 = scmp.lt.s32.totalorder %s16, 1
      %s211 = scalar_select %p210, %s16, 1
      %s212 = smul.addr %s211, 2
      %s213 = smul.addr %s212, 8
      %s214 = scalar_lea.vmem %s5, %s213
      %p215 = scmp.lt.s32.totalorder %s16, 1
      %s216 = scalar_select %p215, %s16, 1
      %s217 = smul.addr %s216, 2
      %s218 = smul.addr %s217, 8
      %s219 = scalar_lea.vmem %s0, %s218
      %p220 = scmp.lt.s32.totalorder %s16, 1
      %s221 = scalar_select %p220, %s16, 1
      %s222 = smul.addr %s221, 2
      %s223 = smul.addr %s222, 8
      %s224 = scalar_lea.vmem %s5, %s223
      %v225 = vld [vmem:[%s219] sm:$0xff]
      %v226 = vld [vmem:[%s219 + $0x8] sm:$0xff]
      %v227 = vrot.slane %v225, 4
      %v228 = vadd.f32 %v225, %v227
      %v229 = vrot.slane %v228, 2
      %v230 = vadd.f32 %v228, %v229
      %v231 = vrot.slane %v230, 1
      %v232 = vadd.f32 %v230, %v231
      %v233 = vrot.slane %v226, 4
      %v234 = vadd.f32 %v226, %v233
      %v235 = vrot.slane %v234, 2
      %v236 = vadd.f32 %v234, %v235
      %v237 = vrot.slane %v236, 1
      %v238 = vadd.f32 %v236, %v237
      %v239 = vrcp.pop 8.0
      %v240 = vmul.f32 8.0, %v239
      %v241 = vsub.f32 1.0, %v240
      %v242 = vmul.f32 %v239, %v241
      %v243 = vadd.f32 %v239, %v242
      %vm244 = vweird.f32 %v239
      %v245 = vsel %vm244, %v239, %v243
      %v246 = vmul.f32 %v232, %v245
      %v247 = vmul.f32 %v238, %v245
      %v248 = vsub.f32 %v225, %v246
      %v249 = vsub.f32 %v226, %v247
      %v250 = vmul.f32 %v248, %v248
      %v251 = vmul.f32 %v249, %v249
      %v252 = vrot.slane %v250, 4
      %v253 = vadd.f32 %v250, %v252
      %v254 = vrot.slane %v253, 2
      %v255 = vadd.f32 %v253, %v254
      %v256 = vrot.slane %v255, 1
      %v257 = vadd.f32 %v255, %v256
      %v258 = vrot.slane %v251, 4
      %v259 = vadd.f32 %v251, %v258
      %v260 = vrot.slane %v259, 2
      %v261 = vadd.f32 %v259, %v260
      %v262 = vrot.slane %v261, 1
      %v263 = vadd.f32 %v261, %v262
      %v264 = vmul.f32 %v257, %v245
      %v265 = vmul.f32 %v263, %v245
      %v266 = vadd.f32 %v264, 1e-06
      %v267 = vadd.f32 %v265, 1e-06
      %v268 = vrsqrt.pop %v266
      %v269 = vmul.f32 %v268, %v266
      %v270 = vmul.f32 %v269, %v268
      %v271 = vmul.f32 0.5, %v270
      %v272 = vsub.f32 1.5, %v271
      %v273 = vmul.f32 %v268, %v272
      %vm274 = vweird.f32 %v266
      %vm275 = vweird.f32 %v268
      %vm276 = vmor %vm274, %vm275
      %v277 = vsel %vm276, %v268, %v273
      %v278 = vrsqrt.pop %v267
      %v279 = vmul.f32 %v278, %v267
      %v280 = vmul.f32 %v279, %v278
      %v281 = vmul.f32 0.5, %v280
      %v282 = vsub.f32 1.5, %v281
      %v283 = vmul.f32 %v278, %v282
      %vm284 = vweird.f32 %v267
      %vm285 = vweird.f32 %v278
      %vm286 = vmor %vm284, %vm285
      %v287 = vsel %vm286, %v278, %v283
      %v288 = vmul.f32 %v248, %v277
      %v289 = vmul.f32 %v249, %v287
      %v290 = vld [vmem:[%s1] sm:$0x3]
      %292 = vset.pattern.permute.xlu0 0
      %293 = vperm.xlu0 %292, %v290
      %v294 = vpop.permute.xlu0 %293
      %v296 = vperm.slane %v288, 0
      %v297 = vperm.slane %v289, 0
      %v298 = vmul.f32 %v294, %v296
      %v299 = vmul.f32 %v294, %v297
      %300 = vset.pattern.permute.xlu0 1
      %301 = vperm.xlu0 %300, %v290
      %v302 = vpop.permute.xlu0 %301
      %v304 = vperm.slane %v288, 1
      %v305 = vperm.slane %v289, 1
      %v306 = vmul.f32 %v302, %v304
      %v307 = vmul.f32 %v302, %v305
      %v308 = vadd.f32 %v298, %v306
      %v309 = vadd.f32 %v299, %v307
      %310 = vset.pattern.permute.xlu0 2
      %311 = vperm.xlu0 %310, %v290
      %v312 = vpop.permute.xlu0 %311
      %v314 = vperm.slane %v288, 2
      %v315 = vperm.slane %v289, 2
      %v316 = vmul.f32 %v312, %v314
      %v317 = vmul.f32 %v312, %v315
      %v318 = vadd.f32 %v308, %v316
      %v319 = vadd.f32 %v309, %v317
      %320 = vset.pattern.permute.xlu0 3
      %321 = vperm.xlu0 %320, %v290
      %v322 = vpop.permute.xlu0 %321
      %v324 = vperm.slane %v288, 3
      %v325 = vperm.slane %v289, 3
      %v326 = vmul.f32 %v322, %v324
      %v327 = vmul.f32 %v322, %v325
      %v328 = vadd.f32 %v318, %v326
      %v329 = vadd.f32 %v319, %v327
      %330 = vset.pattern.permute.xlu0 4
      %331 = vperm.xlu0 %330, %v290
      %v332 = vpop.permute.xlu0 %331
      %v334 = vperm.slane %v288, 4
      %v335 = vperm.slane %v289, 4
      %v336 = vmul.f32 %v332, %v334
      %v337 = vmul.f32 %v332, %v335
      %v338 = vadd.f32 %v328, %v336
      %v339 = vadd.f32 %v329, %v337
      %340 = vset.pattern.permute.xlu0 5
      %341 = vperm.xlu0 %340, %v290
      %v342 = vpop.permute.xlu0 %341
      %v344 = vperm.slane %v288, 5
      %v345 = vperm.slane %v289, 5
      %v346 = vmul.f32 %v342, %v344
      %v347 = vmul.f32 %v342, %v345
      %v348 = vadd.f32 %v338, %v346
      %v349 = vadd.f32 %v339, %v347
      %350 = vset.pattern.permute.xlu0 6
      %351 = vperm.xlu0 %350, %v290
      %v352 = vpop.permute.xlu0 %351
      %v354 = vperm.slane %v288, 6
      %v355 = vperm.slane %v289, 6
      %v356 = vmul.f32 %v352, %v354
      %v357 = vmul.f32 %v352, %v355
      %v358 = vadd.f32 %v348, %v356
      %v359 = vadd.f32 %v349, %v357
      %360 = vset.pattern.permute.xlu0 7
      %361 = vperm.xlu0 %360, %v290
      %v362 = vpop.permute.xlu0 %361
      %v364 = vperm.slane %v288, 7
      %v365 = vperm.slane %v289, 7
      %v366 = vmul.f32 %v362, %v364
      %v367 = vmul.f32 %v362, %v365
      %v368 = vadd.f32 %v358, %v366
      %v369 = vadd.f32 %v359, %v367
      %v370 = vld [vmem:[%s2] sm:$0x3]
      %372 = vset.pattern.permute.xlu0 0
      %373 = vperm.xlu0 %372, %v370
      %v374 = vpop.permute.xlu0 %373
      %v376 = vadd.f32 %v368, %v374
      %v377 = vadd.f32 %v369, %v374
      %v378 = vmul.f32 %v376, 0.5
      %v379 = vmul.f32 %v377, 0.5
      %v380 = vmul.f32 %v376, 0.70710677
      %v381 = vmul.f32 %v377, 0.70710677
      %v382 = vand.u32 2147483647, %v380
      %v383 = vand.u32 2147483647, %v381
      %v384 = vmul.f32 %v382, 0.3275911
      %v385 = vmul.f32 %v383, 0.3275911
      %v386 = vadd.f32 %v384, 1.0
      %v387 = vadd.f32 %v385, 1.0
      %v388 = vrcp.pop %v386
      %v389 = vrcp.pop %v387
      %v390 = vmul.f32 %v386, %v388
      %v391 = vmul.f32 %v387, %v389
      %v392 = vsub.f32 2.0, %v390
      %v393 = vsub.f32 2.0, %v391
      %v394 = vmul.f32 %v388, %v392
      %v395 = vmul.f32 %v389, %v393
      %v396 = vmul.f32 %v394, 1.0614054
      %v397 = vmul.f32 %v395, 1.0614054
      %v398 = vadd.f32 %v396, -1.4531521
      %v399 = vadd.f32 %v397, -1.4531521
      %v400 = vmul.f32 %v398, %v394
      %v401 = vmul.f32 %v399, %v395
      %v402 = vadd.f32 %v400, 1.4214138
      %v403 = vadd.f32 %v401, 1.4214138
      %v404 = vmul.f32 %v402, %v394
      %v405 = vmul.f32 %v403, %v395
      %v406 = vadd.f32 %v404, -0.28449672
      %v407 = vadd.f32 %v405, -0.28449672
      %v408 = vmul.f32 %v406, %v394
      %v409 = vmul.f32 %v407, %v395
      %v410 = vadd.f32 %v408, 0.2548296
      %v411 = vadd.f32 %v409, 0.2548296
      %v412 = vmul.f32 %v410, %v394
      %v413 = vmul.f32 %v411, %v395
      %v414 = vsub.f32 0.0, %v382
      %v415 = vsub.f32 0.0, %v383
      %v416 = vmul.f32 %v414, %v382
      %v417 = vmul.f32 %v415, %v383
      %v418 = vmul.f32 %v416, 1.442695
      %v419 = vpow.pop %v418
      %v420 = vmul.f32 %v417, 1.442695
      %v421 = vpow.pop %v420
      %v422 = vmul.f32 %v412, %v419
      %v423 = vmul.f32 %v413, %v421
      %v424 = vsub.f32 1.0, %v422
      %v425 = vsub.f32 1.0, %v423
      %vm426 = vcmp.ge.f32.partialorder %v380, 0.0
      %vm427 = vcmp.ge.f32.partialorder %v381, 0.0
      %v428 = vsub.f32 0.0, %v424
      %v429 = vsub.f32 0.0, %v425
      %v430 = vsel %vm426, %v424, %v428
      %v431 = vsel %vm427, %v425, %v429
      %v432 = vadd.f32 %v430, 1.0
      %v433 = vadd.f32 %v431, 1.0
      %v434 = vmul.f32 %v378, %v432
      %v435 = vmul.f32 %v379, %v433
      %436 = vset.pattern.permute.xlu0 1
      %437 = vperm.xlu0 %436, %v370
      %v438 = vpop.permute.xlu0 %437
      %v440 = vmul.f32 %v434, %v438
      %v441 = vmul.f32 %v435, %v438
      %vm442 = vcmask 1041408
      %v443 = vsel %vm442, %v440, 0.0
      %v444 = vrot.slane %v443, 4
      %v445 = vadd.f32 %v443, %v444
      %v446 = vrot.slane %v445, 2
      %v447 = vadd.f32 %v445, %v446
      %v448 = vrot.slane %v447, 1
      %v449 = vadd.f32 %v447, %v448
      %v450 = vsel %vm442, %v441, 0.0
      %v451 = vrot.slane %v450, 4
      %v452 = vadd.f32 %v450, %v451
      %v453 = vrot.slane %v452, 2
      %v454 = vadd.f32 %v452, %v453
      %v455 = vrot.slane %v454, 1
      %v456 = vadd.f32 %v454, %v455
      %v457 = vadd.f32 %v288, %v289
      %458 = vadd.xlane.f32.xlu0 %v457
      %v459 = vpop.xlane.xlu0 %458
      %v460 = vmul.f32 %v459, 0.00390625
      %v461 = vld [vmem:[%s3] sm:$0xff]
      %v462 = vmul.f32 %v461, %v460
      %464 = vrot.lane.b32.xlu0 %v461, 127
      %v465 = vpop.permute.xlu0 %464
      %v467 = vadd.f32 %v462, %v465
      %469 = vset.pattern.permute.xlu0 0
      %470 = vperm.xlu0 %469, %v467
      %v471 = vpop.permute.xlu0 %470
      %v473 = vmul.f32 %v461, %v471
      %vm474 = vcmask 39960
      %v475 = vsel %vm474, %v473, 0.0
      %v476 = vrot.slane %v475, 4
      %v477 = vadd.f32 %v475, %v476
      %v478 = vrot.slane %v477, 2
      %v479 = vadd.f32 %v477, %v478
      %v480 = vrot.slane %v479, 1
      %v481 = vadd.f32 %v479, %v480
      %v482 = vld [vmem:[%s4] sm:$0x1]
      %v484 = vperm.slane %v482, 0
      %485 = vrot.lane.b32.xlu0 %v484, 3
      %v486 = vpop.permute.xlu0 %485
      %v488 = vadd.f32 %v481, %v486
      %v489 = vmul.f32 %v488, 0.5
      %v490 = vmul.f32 %v488, 0.70710677
      %v491 = vand.u32 2147483647, %v490
      %v492 = vmul.f32 %v491, 0.3275911
      %v493 = vadd.f32 %v492, 1.0
      %v494 = vrcp.pop %v493
      %v495 = vmul.f32 %v493, %v494
      %v496 = vsub.f32 2.0, %v495
      %v497 = vmul.f32 %v494, %v496
      %v498 = vmul.f32 %v497, 1.0614054
      %v499 = vadd.f32 %v498, -1.4531521
      %v500 = vmul.f32 %v499, %v497
      %v501 = vadd.f32 %v500, 1.4214138
      %v502 = vmul.f32 %v501, %v497
      %v503 = vadd.f32 %v502, -0.28449672
      %v504 = vmul.f32 %v503, %v497
      %v505 = vadd.f32 %v504, 0.2548296
      %v506 = vmul.f32 %v505, %v497
      %v507 = vsub.f32 0.0, %v491
      %v508 = vmul.f32 %v507, %v491
      %v509 = vmul.f32 %v508, 1.442695
      %v510 = vpow.pop %v509
      %v511 = vmul.f32 %v506, %v510
      %v512 = vsub.f32 1.0, %v511
      %vm513 = vcmp.ge.f32.partialorder %v490, 0.0
      %v514 = vsub.f32 0.0, %v512
      %v515 = vsel %vm513, %v512, %v514
      %v516 = vadd.f32 %v515, 1.0
      %v517 = vmul.f32 %v489, %v516
      %v518 = vperm.slane %v517, 0
      %520 = vrot.lane.b32.xlu0 %v518, 2
      %v521 = vpop.permute.xlu0 %520
      %v523 = vmul.f32 %v461, %v521
      %525 = vrot.lane.b32.xlu0 %v523, 123
      %v526 = vpop.permute.xlu0 %525
      %vm528 = vcmask 15360
      %v529 = vsel %vm528, %v526, 0.0
      %530 = vadd.xlane.f32.xlu0 %v529
      %v531 = vpop.xlane.xlu0 %530
      %v532 = vadd.f32 %v531, %v461
      %v533 = vmax.f32 %v532, -60.0
      %v534 = vsub.f32 0.0, %v533
      %v535 = vmul.f32 %v534, 1.442695
      %v536 = vpow.pop %v535
      %v537 = vadd.f32 %v536, 1.0
      %v538 = vrcp.pop %v537
      %v539 = vmul.f32 %v537, %v538
      %v540 = vsub.f32 2.0, %v539
      %v541 = vmul.f32 %v538, %v540
      %543 = vrot.lane.b32.xlu0 %v517, 127
      %v544 = vpop.permute.xlu0 %543
      %v546 = vmul.f32 %v482, %v544
      %v548 = vperm.slane %v546, 0
      %549 = vrot.lane.b32.xlu0 %v548, 126
      %v550 = vpop.permute.xlu0 %549
      %vm552 = vcmask 8192
      %v553 = vsel %vm552, %v550, 0.0
      %554 = vadd.xlane.f32.xlu0 %v553
      %v555 = vpop.xlane.xlu0 %554
      %556 = vrot.lane.b32.xlu0 %v484, 124
      %v557 = vpop.permute.xlu0 %556
      %v559 = vadd.f32 %v555, %v557
      %561 = vset.pattern.permute.xlu0 0
      %562 = vperm.xlu0 %561, %v559
      %v563 = vpop.permute.xlu0 %562
      %v565 = vadd.f32 %v449, %v563
      %v566 = vadd.f32 %v456, %v563
      %v567 = vmax.f32 %v565, -60.0
      %v568 = vmax.f32 %v566, -60.0
      %v569 = vsub.f32 0.0, %v567
      %v570 = vsub.f32 0.0, %v568
      %v571 = vmul.f32 %v569, 1.442695
      %v572 = vpow.pop %v571
      %v573 = vmul.f32 %v570, 1.442695
      %v574 = vpow.pop %v573
      %v575 = vadd.f32 %v572, 1.0
      %v576 = vadd.f32 %v574, 1.0
      %v577 = vrcp.pop %v575
      %v578 = vrcp.pop %v576
      %v579 = vmul.f32 %v575, %v577
      %v580 = vmul.f32 %v576, %v578
      %v581 = vsub.f32 2.0, %v579
      %v582 = vsub.f32 2.0, %v580
      %v583 = vmul.f32 %v577, %v581
      %v584 = vmul.f32 %v578, %v582
      %586 = vset.pattern.permute.xlu0 2
      %587 = vperm.xlu0 %586, %v541
      %v588 = vpop.permute.xlu0 %587
      %v590 = vperm.slane %v583, 0
      %v591 = vperm.slane %v584, 0
      %v592 = vmul.f32 %v588, %v590
      %v593 = vmul.f32 %v588, %v591
      %v594 = vmul.f32 %v225, %v592
      %v595 = vmul.f32 %v226, %v593
      %596 = vst [vmem:[%s224] sm:$0xff] %v594
      %597 = vst [vmem:[%s224 + $0x8] sm:$0xff] %v595
      %p598 = scmp.lt.s32.totalorder %s16, 1
      %s599 = scalar_select %p598, %s16, 1
      %s600 = smul.addr %s599, 2
      %s601 = smul.addr %s600, 8
      %s602 = scalar_lea.vmem %s5, %s601
      // Predicated region
      $region41: #{dffm_forward.1} parent=39 // pred_check
        %p603 = pneg %p144
      $region42: #{dffm_forward.1} parent=39 // pred_check_branch
        %605 = sbr.rel (%p603) target = $region44
      $region43: #{dffm_forward.1} parent=39 // pred_region
        _
      $region44: #{dffm_forward.1} parent=39 // pred_fallthru
        _
    $region40: #{dffm_forward.1} parent=5 // pred_fallthru
      _
    %p606 = scmp.le.s32.totalorder 2, %s11
    // Predicated region
    $region45: #{dffm_forward.1} parent=5 // pred_check
      %p607 = pneg %p606
    $region46: #{dffm_forward.1} parent=5 // pred_check_branch
      %609 = sbr.rel (%p607) target = $region48
    $region47: #{dffm_forward.1} parent=5 // pred_region
      %s610 = ssub.s32 %s11, 2
      // Predicated region
      $region49: #{dffm_forward.1} parent=47 // pred_check
        %p611 = pneg %p150
      $region50: #{dffm_forward.1} parent=47 // pred_check_branch
        %613 = sbr.rel (%p611) target = $region52
      $region51: #{dffm_forward.1} parent=47 // pred_region
        %p614 = scmp.lt.s32.totalorder %s17, 1
        %s615 = scalar_select %p614, %s17, 1
        %s616 = smul.addr %s615, 2
        %s617 = smul.addr %s616, 8
        %s618 = scalar_lea.vmem %s5, %s617
      $region52: #{dffm_forward.1} parent=47 // pred_fallthru
        _
    $region48: #{dffm_forward.1} parent=5 // pred_fallthru
      _
  $region6: #{dffm_forward.1} parent=0 // loop_footer
    %s15 = sadd.s32 1, %s11
  $region7: #{dffm_forward.1} parent=0 // loop_footer_branch
    %10 = sbr.rel target = $region3
  $region8: #{dffm_forward.1} parent=0 // loop_exit
    _

</llo_original>
